<compile_context>
chip_gen: v5e
topology: v5e:2x2
jax: 0.10.0
libtpu: 0.0.40
codegen_flags: <defaults>
</compile_context>

<pallas_src>
import jax
import jax.numpy as jnp
import numpy as np
from jax.experimental import pallas as pl
from jax.experimental.pallas import tpu as pltpu


# ------------------------------ fused kernel ------------------------------- #
def _drcnn_kernel(xre_ref, xim_ref, w1_ref, gamma_ref, beta_ref, w2_ref, b2_ref,
                  out_ref):
    # xre/xim : (B, T, C)  real / imaginary parts of the complex input
    # w1      : (K, C)     depthwise conv taps (PyTorch weight (C, 1, K) transposed)
    # gamma   : (1, 1, C)  norm scale      beta : (1, 1, C) norm shift
    # w2      : (C, O)     1x1 conv weight (PyTorch (O, C, 1) transposed)
    # b2      : (1, O)     1x1 conv bias
    # out     : (B, T, O)
    re = xre_ref[...]
    im = xim_ref[...]
    mag = jnp.sqrt(re * re + im * im)                      # complex2real = 'abs'

    B, T, C = mag.shape
    K = w1_ref.shape[0]

    # Depthwise causal conv (no bias):
    #   y[b, t, c] = sum_k w1[k, c] * mag[b, t - (K-1-k), c], zero-padded on the left.
    y = jnp.zeros_like(mag)
    for k in range(K):                                     # static unroll over taps
        shift = K - 1 - k
        if shift == 0:
            xs = mag
        else:
            xs = jnp.concatenate(
                [jnp.zeros_like(mag[:, :shift, :]), mag[:, :-shift, :]], axis=1)
        y = y + xs * w1_ref[k:k + 1, :]

    # AdaptiveNormalization (assumed): per-channel stats over (batch, time) + affine.
    mean = jnp.mean(jnp.mean(y, axis=1, keepdims=True), axis=0, keepdims=True)
    d = y - mean
    var = jnp.mean(jnp.mean(d * d, axis=1, keepdims=True), axis=0, keepdims=True)
    yn = d * jax.lax.rsqrt(var + 1e-5) * gamma_ref[...] + beta_ref[...]

    # 1x1 conv == channel matmul; one MXU dot per batch row (B is tiny, static unroll).
    for b in range(B):
        out_ref[b, :, :] = (
            jnp.dot(yn[b], w2_ref[...], preferred_element_type=jnp.float32)
            + b2_ref[...]
        ).astype(out_ref.dtype)


# --------------------------------- wrapper ---------------------------------- #
def drcnn_forward(x_cplx, params):
    """x_cplx: (B, C, T) complex64 (PyTorch Conv1d layout). Returns (B, chout, T) f32."""
    B, C, T = x_cplx.shape
    xr = jnp.transpose(jnp.real(x_cplx), (0, 2, 1)).astype(jnp.float32)   # (B, T, C)
    xi = jnp.transpose(jnp.imag(x_cplx), (0, 2, 1)).astype(jnp.float32)   # (B, T, C)

    w1 = jnp.asarray(params["w1"], jnp.float32).T                          # (K, C)
    gamma = jnp.asarray(params["gamma"], jnp.float32).reshape(1, 1, C)
    beta = jnp.asarray(params["beta"], jnp.float32).reshape(1, 1, C)
    w2 = jnp.asarray(params["w2"], jnp.float32).T                          # (C, O)
    b2 = jnp.asarray(params["b2"], jnp.float32).reshape(1, -1)             # (1, O)
    K = w1.shape[0]
    O = w2.shape[1]

    out_bto = pl.pallas_call(
        _drcnn_kernel,
        out_shape=jax.ShapeDtypeStruct((B, T, O), jnp.float32),
        grid=(1,),
        in_specs=[
            pl.BlockSpec((B, T, C), lambda i: (0, 0, 0)),   # x real
            pl.BlockSpec((B, T, C), lambda i: (0, 0, 0)),   # x imag
            pl.BlockSpec((K, C), lambda i: (0, 0)),         # depthwise taps
            pl.BlockSpec((1, 1, C), lambda i: (0, 0, 0)),   # gamma
            pl.BlockSpec((1, 1, C), lambda i: (0, 0, 0)),   # beta
            pl.BlockSpec((C, O), lambda i: (0, 0)),         # 1x1 conv weight
            pl.BlockSpec((1, O), lambda i: (0, 0)),         # 1x1 conv bias
        ],
        out_specs=pl.BlockSpec((B, T, O), lambda i: (0, 0, 0)),
        compiler_params=pltpu.CompilerParams(
            dimension_semantics=("arbitrary",)),
    )(xr, xi, w1, gamma, beta, w2, b2)

    return jnp.transpose(out_bto, (0, 2, 1))                # back to (B, chout, T)


# --------------------------------- params ----------------------------------- #
def init_drcnn_params(key, C, chout, kernel_size=3):
    k1, k2, k3 = jax.random.split(key, 3)
    b1 = 1.0 / np.sqrt(kernel_size)        # Conv1d fan_in = (in_ch/groups) * K = K
    b2b = 1.0 / np.sqrt(C)                 # Conv1d fan_in = C * 1
    return dict(
        w1=jax.random.uniform(k1, (C, kernel_size), jnp.float32, -b1, b1),  # (C,1,K)→(C,K)
        gamma=jnp.ones((C,), jnp.float32),
        beta=jnp.zeros((C,), jnp.float32),
        w2=jax.random.uniform(k2, (chout, C), jnp.float32, -b2b, b2b),      # (O,C,1)→(O,C)
        b2=jax.random.uniform(k3, (chout,), jnp.float32, -b2b, b2b),
    )


# ------------------------ pure-JAX reference (validation) ------------------- #
def _ref_forward(x_cplx, params):
    B, C, T = x_cplx.shape
    w1 = params["w1"]                                      # (C, K)
    K = w1.shape[1]
    mag = jnp.abs(x_cplx).astype(jnp.float32)              # (B, C, T)
    xp = jnp.pad(mag, ((0, 0), (0, 0), (K - 1, 0)))        # causal left pad
    y = sum(w1[None, :, k:k + 1] * xp[:, :, k:k + T] for k in range(K))
    mean = jnp.mean(y, axis=(0, 2), keepdims=True)
    var = jnp.mean(jnp.square(y - mean), axis=(0, 2), keepdims=True)
    yn = (y - mean) * jax.lax.rsqrt(var + 1e-5) \
        * params["gamma"][None, :, None] + params["beta"][None, :, None]
    return jnp.einsum("oc,bct->bot", params["w2"], yn) + params["b2"][None, :, None]


# ---------------------------------- main ------------------------------------ #
if __name__ == "__main__":
    WIN_SIZE = 32                       # GlobalConfig.win_size
    C = WIN_SIZE + 1                    # 33 frequency channels
    B, T, CHOUT, KSIZE = 2, 16, 32, 3

    key = jax.random.PRNGKey(0)
    kxr, kxi, kp = jax.random.split(key, 3)
    x = (jax.random.normal(kxr, (B, C, T), jnp.float32)
         + 1j * jax.random.normal(kxi, (B, C, T), jnp.float32)).astype(jnp.complex64)

    params = init_drcnn_params(kp, C, CHOUT, KSIZE)

    out = jax.block_until_ready(drcnn_forward(x, params))
    ref = jax.block_until_ready(_ref_forward(x, params))

    assert out.shape == (B, CHOUT, T), out.shape
    np.testing.assert_allclose(np.asarray(out), np.asarray(ref), rtol=2e-3, atol=2e-3)
    print("KERNEL_OK")
</pallas_src>

<mosaic_0001>
module attributes {stable_mosaic.version = 11 : i64} {
  func.func @_drcnn_kernel(%arg0: i32, %arg1: memref<2x16x33xf32, #tpu.memory_space<vmem>>, %arg2: memref<2x16x33xf32, #tpu.memory_space<vmem>>, %arg3: memref<3x33xf32, #tpu.memory_space<vmem>>, %arg4: memref<1x1x33xf32, #tpu.memory_space<vmem>>, %arg5: memref<1x1x33xf32, #tpu.memory_space<vmem>>, %arg6: memref<33x32xf32, #tpu.memory_space<vmem>>, %arg7: memref<1x32xf32, #tpu.memory_space<vmem>>, %arg8: memref<2x16x32xf32, #tpu.memory_space<vmem>>) attributes {dimension_semantics = [#tpu.dimension_semantics<arbitrary>], iteration_bounds = array<i64: 1>, scalar_prefetch = 0 : i64, scratch_operands = 0 : i64, tpu.core_type = #tpu.core_type<tc>, window_params = [{pipeline_mode = #tpu.pipeline_mode<synchronous>, transform_indices = @transform_0, window_bounds = array<i64: 2, 16, 33>}, {pipeline_mode = #tpu.pipeline_mode<synchronous>, transform_indices = @transform_1, window_bounds = array<i64: 2, 16, 33>}, {pipeline_mode = #tpu.pipeline_mode<synchronous>, transform_indices = @transform_2, window_bounds = array<i64: 3, 33>}, {pipeline_mode = #tpu.pipeline_mode<synchronous>, transform_indices = @transform_3, window_bounds = array<i64: 1, 1, 33>}, {pipeline_mode = #tpu.pipeline_mode<synchronous>, transform_indices = @transform_4, window_bounds = array<i64: 1, 1, 33>}, {pipeline_mode = #tpu.pipeline_mode<synchronous>, transform_indices = @transform_5, window_bounds = array<i64: 33, 32>}, {pipeline_mode = #tpu.pipeline_mode<synchronous>, transform_indices = @transform_6, window_bounds = array<i64: 1, 32>}, {pipeline_mode = #tpu.pipeline_mode<synchronous>, transform_indices = @transform_7, window_bounds = array<i64: 2, 16, 32>}]} {
    %c0 = arith.constant 0 : index
    %c0_0 = arith.constant 0 : index
    %c0_1 = arith.constant 0 : index
    %0 = vector.load %arg1[%c0, %c0_0, %c0_1] : memref<2x16x33xf32, #tpu.memory_space<vmem>>, vector<2x16x33xf32>
    %c0_2 = arith.constant 0 : index
    %c0_3 = arith.constant 0 : index
    %c0_4 = arith.constant 0 : index
    %1 = vector.load %arg2[%c0_2, %c0_3, %c0_4] : memref<2x16x33xf32, #tpu.memory_space<vmem>>, vector<2x16x33xf32>
    %2 = arith.mulf %0, %0 : vector<2x16x33xf32>
    %3 = arith.mulf %1, %1 : vector<2x16x33xf32>
    %4 = arith.addf %2, %3 : vector<2x16x33xf32>
    %5 = math.sqrt %4 : vector<2x16x33xf32>
    %cst = arith.constant 0.000000e+00 : f32
    %6 = vector.broadcast %cst : f32 to vector<2x16x33xf32>
    %cst_5 = arith.constant 0.000000e+00 : f32
    %7 = vector.broadcast %cst_5 : f32 to vector<2x2x33xf32>
    %8 = vector.extract_strided_slice %5 {offsets = [0, 0, 0], sizes = [2, 14, 33], strides = [1, 1, 1]} : vector<2x16x33xf32> to vector<2x14x33xf32>
    %9 = tpu.concatenate %7, %8 in 1 : vector<2x2x33xf32>, vector<2x14x33xf32> -> vector<2x16x33xf32>
    %c0_6 = arith.constant 0 : index
    %c0_7 = arith.constant 0 : index
    %10 = vector.load %arg3[%c0_6, %c0_7] : memref<3x33xf32, #tpu.memory_space<vmem>>, vector<1x33xf32>
    %11 = vector.shape_cast %10 : vector<1x33xf32> to vector<1x1x33xf32>
    %12 = vector.broadcast %11 : vector<1x1x33xf32> to vector<2x16x33xf32>
    %13 = arith.mulf %9, %12 : vector<2x16x33xf32>
    %14 = arith.addf %6, %13 : vector<2x16x33xf32>
    %cst_8 = arith.constant 0.000000e+00 : f32
    %15 = vector.broadcast %cst_8 : f32 to vector<2x1x33xf32>
    %16 = vector.extract_strided_slice %5 {offsets = [0, 0, 0], sizes = [2, 15, 33], strides = [1, 1, 1]} : vector<2x16x33xf32> to vector<2x15x33xf32>
    %17 = tpu.concatenate %15, %16 in 1 : vector<2x1x33xf32>, vector<2x15x33xf32> -> vector<2x16x33xf32>
    %c1 = arith.constant 1 : index
    %c0_9 = arith.constant 0 : index
    %18 = vector.load %arg3[%c1, %c0_9] : memref<3x33xf32, #tpu.memory_space<vmem>>, vector<1x33xf32>
    %19 = vector.shape_cast %18 : vector<1x33xf32> to vector<1x1x33xf32>
    %20 = vector.broadcast %19 : vector<1x1x33xf32> to vector<2x16x33xf32>
    %21 = arith.mulf %17, %20 : vector<2x16x33xf32>
    %22 = arith.addf %14, %21 : vector<2x16x33xf32>
    %c2 = arith.constant 2 : index
    %c0_10 = arith.constant 0 : index
    %23 = vector.load %arg3[%c2, %c0_10] : memref<3x33xf32, #tpu.memory_space<vmem>>, vector<1x33xf32>
    %24 = vector.shape_cast %23 : vector<1x33xf32> to vector<1x1x33xf32>
    %25 = vector.broadcast %24 : vector<1x1x33xf32> to vector<2x16x33xf32>
    %26 = arith.mulf %5, %25 : vector<2x16x33xf32>
    %27 = arith.addf %22, %26 : vector<2x16x33xf32>
    %cst_11 = arith.constant dense<0.000000e+00> : vector<2x33xf32>
    %28 = vector.multi_reduction <add>, %27, %cst_11 [1] : vector<2x16x33xf32> to vector<2x33xf32>
    %29 = vector.shape_cast %28 : vector<2x33xf32> to vector<2x1x33xf32>
    %cst_12 = arith.constant 1.600000e+01 : f32
    %30 = vector.broadcast %cst_12 : f32 to vector<2x1x33xf32>
    %31 = arith.divf %29, %30 : vector<2x1x33xf32>
    %cst_13 = arith.constant dense<0.000000e+00> : vector<1x33xf32>
    %32 = vector.multi_reduction <add>, %31, %cst_13 [0] : vector<2x1x33xf32> to vector<1x33xf32>
    %33 = vector.shape_cast %32 : vector<1x33xf32> to vector<1x1x33xf32>
    %cst_14 = arith.constant 2.000000e+00 : f32
    %34 = vector.broadcast %cst_14 : f32 to vector<1x1x33xf32>
    %35 = arith.divf %33, %34 : vector<1x1x33xf32>
    %36 = vector.broadcast %35 : vector<1x1x33xf32> to vector<2x16x33xf32>
    %37 = arith.subf %27, %36 : vector<2x16x33xf32>
    %38 = arith.mulf %37, %37 : vector<2x16x33xf32>
    %cst_15 = arith.constant dense<0.000000e+00> : vector<2x33xf32>
    %39 = vector.multi_reduction <add>, %38, %cst_15 [1] : vector<2x16x33xf32> to vector<2x33xf32>
    %40 = vector.shape_cast %39 : vector<2x33xf32> to vector<2x1x33xf32>
    %cst_16 = arith.constant 1.600000e+01 : f32
    %41 = vector.broadcast %cst_16 : f32 to vector<2x1x33xf32>
    %42 = arith.divf %40, %41 : vector<2x1x33xf32>
    %cst_17 = arith.constant dense<0.000000e+00> : vector<1x33xf32>
    %43 = vector.multi_reduction <add>, %42, %cst_17 [0] : vector<2x1x33xf32> to vector<1x33xf32>
    %44 = vector.shape_cast %43 : vector<1x33xf32> to vector<1x1x33xf32>
    %cst_18 = arith.constant 2.000000e+00 : f32
    %45 = vector.broadcast %cst_18 : f32 to vector<1x1x33xf32>
    %46 = arith.divf %44, %45 : vector<1x1x33xf32>
    %cst_19 = arith.constant 9.99999974E-6 : f32
    %47 = vector.broadcast %cst_19 : f32 to vector<1x1x33xf32>
    %48 = arith.addf %46, %47 : vector<1x1x33xf32>
    %49 = math.rsqrt %48 : vector<1x1x33xf32>
    %50 = vector.broadcast %49 : vector<1x1x33xf32> to vector<2x16x33xf32>
    %51 = arith.mulf %37, %50 : vector<2x16x33xf32>
    %c0_20 = arith.constant 0 : index
    %c0_21 = arith.constant 0 : index
    %c0_22 = arith.constant 0 : index
    %52 = vector.load %arg4[%c0_20, %c0_21, %c0_22] : memref<1x1x33xf32, #tpu.memory_space<vmem>>, vector<1x1x33xf32>
    %53 = vector.broadcast %52 : vector<1x1x33xf32> to vector<2x16x33xf32>
    %54 = arith.mulf %51, %53 : vector<2x16x33xf32>
    %c0_23 = arith.constant 0 : index
    %c0_24 = arith.constant 0 : index
    %c0_25 = arith.constant 0 : index
    %55 = vector.load %arg5[%c0_23, %c0_24, %c0_25] : memref<1x1x33xf32, #tpu.memory_space<vmem>>, vector<1x1x33xf32>
    %56 = vector.broadcast %55 : vector<1x1x33xf32> to vector<2x16x33xf32>
    %57 = arith.addf %54, %56 : vector<2x16x33xf32>
    %58 = vector.extract_strided_slice %57 {offsets = [0, 0, 0], sizes = [1, 16, 33], strides = [1, 1, 1]} : vector<2x16x33xf32> to vector<1x16x33xf32>
    %59 = vector.shape_cast %58 : vector<1x16x33xf32> to vector<16x33xf32>
    %c0_26 = arith.constant 0 : index
    %c0_27 = arith.constant 0 : index
    %60 = vector.load %arg6[%c0_26, %c0_27] : memref<33x32xf32, #tpu.memory_space<vmem>>, vector<33x32xf32>
    %cst_28 = arith.constant dense<0.000000e+00> : vector<16x32xf32>
    %61 = tpu.matmul %59, %60, %cst_28 {dimension_numbers = #tpu.dot_dimension_numbers<[1], [0], [0], [1], [0, 0, 1, 1], [], []>} : vector<16x33xf32>, vector<33x32xf32>, vector<16x32xf32> -> vector<16x32xf32>
    %c0_29 = arith.constant 0 : index
    %c0_30 = arith.constant 0 : index
    %62 = vector.load %arg7[%c0_29, %c0_30] : memref<1x32xf32, #tpu.memory_space<vmem>>, vector<1x32xf32>
    %63 = vector.broadcast %62 : vector<1x32xf32> to vector<16x32xf32>
    %64 = arith.addf %61, %63 : vector<16x32xf32>
    %c0_31 = arith.constant 0 : index
    %c0_32 = arith.constant 0 : index
    %c0_33 = arith.constant 0 : index
    %65 = vector.load %arg8[%c0_31, %c0_32, %c0_33] : memref<2x16x32xf32, #tpu.memory_space<vmem>>, vector<1x16x32xf32>
    %66 = vector.shape_cast %65 : vector<1x16x32xf32> to vector<16x32xf32>
    %67 = vector.shape_cast %64 : vector<16x32xf32> to vector<1x16x32xf32>
    tpu.vector_store %arg8[%c0_31, %c0_32, %c0_33], %67 {strides = array<i32>} : memref<2x16x32xf32, #tpu.memory_space<vmem>>, vector<1x16x32xf32>,
    %68 = vector.extract_strided_slice %57 {offsets = [1, 0, 0], sizes = [1, 16, 33], strides = [1, 1, 1]} : vector<2x16x33xf32> to vector<1x16x33xf32>
    %69 = vector.shape_cast %68 : vector<1x16x33xf32> to vector<16x33xf32>
    %c0_34 = arith.constant 0 : index
    %c0_35 = arith.constant 0 : index
    %70 = vector.load %arg6[%c0_34, %c0_35] : memref<33x32xf32, #tpu.memory_space<vmem>>, vector<33x32xf32>
    %cst_36 = arith.constant dense<0.000000e+00> : vector<16x32xf32>
    %71 = tpu.matmul %69, %70, %cst_36 {dimension_numbers = #tpu.dot_dimension_numbers<[1], [0], [0], [1], [0, 0, 1, 1], [], []>} : vector<16x33xf32>, vector<33x32xf32>, vector<16x32xf32> -> vector<16x32xf32>
    %c0_37 = arith.constant 0 : index
    %c0_38 = arith.constant 0 : index
    %72 = vector.load %arg7[%c0_37, %c0_38] : memref<1x32xf32, #tpu.memory_space<vmem>>, vector<1x32xf32>
    %73 = vector.broadcast %72 : vector<1x32xf32> to vector<16x32xf32>
    %74 = arith.addf %71, %73 : vector<16x32xf32>
    %c1_39 = arith.constant 1 : index
    %c0_40 = arith.constant 0 : index
    %c0_41 = arith.constant 0 : index
    %75 = vector.load %arg8[%c1_39, %c0_40, %c0_41] : memref<2x16x32xf32, #tpu.memory_space<vmem>>, vector<1x16x32xf32>
    %76 = vector.shape_cast %75 : vector<1x16x32xf32> to vector<16x32xf32>
    %77 = vector.shape_cast %74 : vector<16x32xf32> to vector<1x16x32xf32>
    tpu.vector_store %arg8[%c1_39, %c0_40, %c0_41], %77 {strides = array<i32>} : memref<2x16x32xf32, #tpu.memory_space<vmem>>, vector<1x16x32xf32>,
    return
  }
  func.func @transform_0(%arg0: i32) -> (i32, i32, i32) {
    %c0_i32 = arith.constant 0 : i32
    %c0_i32_0 = arith.constant 0 : i32
    %c0_i32_1 = arith.constant 0 : i32
    %c0_i32_2 = arith.constant 0 : i32
    return %c0_i32, %c0_i32_0, %c0_i32_1 : i32, i32, i32
  }
  func.func @transform_1(%arg0: i32) -> (i32, i32, i32) {
    %c0_i32 = arith.constant 0 : i32
    %c0_i32_0 = arith.constant 0 : i32
    %c0_i32_1 = arith.constant 0 : i32
    %c0_i32_2 = arith.constant 0 : i32
    return %c0_i32, %c0_i32_0, %c0_i32_1 : i32, i32, i32
  }
  func.func @transform_2(%arg0: i32) -> (i32, i32) {
    %c0_i32 = arith.constant 0 : i32
    %c0_i32_0 = arith.constant 0 : i32
    %c0_i32_1 = arith.constant 0 : i32
    return %c0_i32, %c0_i32_0 : i32, i32
  }
  func.func @transform_3(%arg0: i32) -> (i32, i32, i32) {
    %c0_i32 = arith.constant 0 : i32
    %c0_i32_0 = arith.constant 0 : i32
    %c0_i32_1 = arith.constant 0 : i32
    %c0_i32_2 = arith.constant 0 : i32
    return %c0_i32, %c0_i32_0, %c0_i32_1 : i32, i32, i32
  }
  func.func @transform_4(%arg0: i32) -> (i32, i32, i32) {
    %c0_i32 = arith.constant 0 : i32
    %c0_i32_0 = arith.constant 0 : i32
    %c0_i32_1 = arith.constant 0 : i32
    %c0_i32_2 = arith.constant 0 : i32
    return %c0_i32, %c0_i32_0, %c0_i32_1 : i32, i32, i32
  }
  func.func @transform_5(%arg0: i32) -> (i32, i32) {
    %c0_i32 = arith.constant 0 : i32
    %c0_i32_0 = arith.constant 0 : i32
    %c0_i32_1 = arith.constant 0 : i32
    return %c0_i32, %c0_i32_0 : i32, i32
  }
  func.func @transform_6(%arg0: i32) -> (i32, i32) {
    %c0_i32 = arith.constant 0 : i32
    %c0_i32_0 = arith.constant 0 : i32
    %c0_i32_1 = arith.constant 0 : i32
    return %c0_i32, %c0_i32_0 : i32, i32
  }
  func.func @transform_7(%arg0: i32) -> (i32, i32, i32) {
    %c0_i32 = arith.constant 0 : i32
    %c0_i32_0 = arith.constant 0 : i32
    %c0_i32_1 = arith.constant 0 : i32
    %c0_i32_2 = arith.constant 0 : i32
    return %c0_i32, %c0_i32_0, %c0_i32_1 : i32, i32, i32
  }
}

</mosaic_0001>

<llo_original>
// kernel: tpu_custom_call.1
$region0: #{tpu_custom_call.1}
  #allocation0 [shape = 'u32[]', space=smem, size = 0x4, offset = 0x4, fixed_abs, tag = 'smem constant byte address 0x4 - core index']
  #allocation1 [shape = 'u32[72,128]{1,0:T(1,128)}', space=vmem, size = 0x9000, scoped, tag = 'internal scratch']
  %s0 = inlined_call_operand.vmem [shape: f32[2,16,33], index: 0, kind: input, shape index: {}]
  %s1 = inlined_call_operand.vmem [shape: f32[2,16,33], index: 1, kind: input, shape index: {}]
  %s2 = inlined_call_operand.vmem [shape: f32[3,33], index: 2, kind: input, shape index: {}]
  %s3 = inlined_call_operand.vmem [shape: f32[1,1,33], index: 3, kind: input, shape index: {}]
  %s4 = inlined_call_operand.vmem [shape: f32[1,1,33], index: 4, kind: input, shape index: {}]
  %s5 = inlined_call_operand.vmem [shape: f32[33,32], index: 5, kind: input, shape index: {}]
  %s6 = inlined_call_operand.vmem [shape: f32[1,32], index: 6, kind: input, shape index: {}]
  %s7 = inlined_call_operand.hbm [shape: f32[2,16,32], index: 7, kind: output, shape index: {}]
  %s8 = sld [smem:[#allocation0]]
  $region38: #{tpu_custom_call.1} parent=0
    _
  %s10 = ssub.s32 1, %s8
  %s11 = scalar_select 0, %s10, %s8
  $region1: #{tpu_custom_call.1} parent=0
    #allocation2 [shape = 'u8[16384]{0}', space=vmem, size = 0x4000, scoped, tag = 'output window, operand 0, single buffered']
    #allocation3 [shape = 's32[1]{0}', space=sflag, size = 0x4, scoped, tag = 'scoped memory for tpu_custom_call.1']
    %12 = vsyncpa [#allocation3], 0
    // Predicated region
    $region2: #{tpu_custom_call.1} parent=1 // pred_check
      _
    $region3: #{tpu_custom_call.1} parent=1 // pred_check_branch
      %14 = sbr.rel (0) target = $region5
    $region4: #{tpu_custom_call.1} parent=1 // pred_region
      _
    $region5: #{tpu_custom_call.1} parent=1 // pred_fallthru
      _
    // Predicated region
    $region6: #{tpu_custom_call.1} parent=1 // pred_check
      _
    $region7: #{tpu_custom_call.1} parent=1 // pred_check_branch
      %16 = sbr.rel (0) target = $region9
    $region8: #{tpu_custom_call.1} parent=1 // pred_region
      _
    $region9: #{tpu_custom_call.1} parent=1 // pred_fallthru
      _
    // Predicated region
    $region10: #{tpu_custom_call.1} parent=1 // pred_check
      _
    $region11: #{tpu_custom_call.1} parent=1 // pred_check_branch
      %18 = sbr.rel (0) target = $region13
    $region12: #{tpu_custom_call.1} parent=1 // pred_region
      _
    $region13: #{tpu_custom_call.1} parent=1 // pred_fallthru
      _
    // Predicated region
    $region14: #{tpu_custom_call.1} parent=1 // pred_check
      _
    $region15: #{tpu_custom_call.1} parent=1 // pred_check_branch
      %20 = sbr.rel (0) target = $region17
    $region16: #{tpu_custom_call.1} parent=1 // pred_region
      _
    $region17: #{tpu_custom_call.1} parent=1 // pred_fallthru
      _
    // Predicated region
    $region18: #{tpu_custom_call.1} parent=1 // pred_check
      _
    $region19: #{tpu_custom_call.1} parent=1 // pred_check_branch
      %22 = sbr.rel (0) target = $region21
    $region20: #{tpu_custom_call.1} parent=1 // pred_region
      _
    $region21: #{tpu_custom_call.1} parent=1 // pred_fallthru
      _
    // Predicated region
    $region22: #{tpu_custom_call.1} parent=1 // pred_check
      _
    $region23: #{tpu_custom_call.1} parent=1 // pred_check_branch
      %24 = sbr.rel (0) target = $region25
    $region24: #{tpu_custom_call.1} parent=1 // pred_region
      _
    $region25: #{tpu_custom_call.1} parent=1 // pred_fallthru
      _
    // Predicated region
    $region26: #{tpu_custom_call.1} parent=1 // pred_check
      _
    $region27: #{tpu_custom_call.1} parent=1 // pred_check_branch
      %26 = sbr.rel (0) target = $region29
    $region28: #{tpu_custom_call.1} parent=1 // pred_region
      _
    $region29: #{tpu_custom_call.1} parent=1 // pred_fallthru
      _
    %v27 = vld [vmem:[%s0] sm:$0xff]
    %v28 = vld [vmem:[%s0 + $0x8] sm:$0xff]
    %v29 = vld [vmem:[%s0 + $0x10] sm:$0xff]
    %v30 = vld [vmem:[%s0 + $0x18] sm:$0xff]
    %v31 = vld [vmem:[%s1] sm:$0xff]
    %v32 = vld [vmem:[%s1 + $0x8] sm:$0xff]
    %v33 = vld [vmem:[%s1 + $0x10] sm:$0xff]
    %v34 = vld [vmem:[%s1 + $0x18] sm:$0xff]
    %v35 = vmul.f32 %v27, %v27
    %v36 = vmul.f32 %v28, %v28
    %v37 = vmul.f32 %v29, %v29
    %v38 = vmul.f32 %v30, %v30
    %v39 = vmul.f32 %v31, %v31
    %v40 = vmul.f32 %v32, %v32
    %v41 = vmul.f32 %v33, %v33
    %v42 = vmul.f32 %v34, %v34
    %v43 = vadd.f32 %v35, %v39
    %v44 = vadd.f32 %v36, %v40
    %v45 = vadd.f32 %v37, %v41
    %v46 = vadd.f32 %v38, %v42
    %v47 = vrsqrt.pop %v43
    %v48 = vmul.f32 %v47, %v43
    %v49 = vmul.f32 %v48, %v47
    %v50 = vmul.f32 0.5, %v49
    %v51 = vsub.f32 1.5, %v50
    %v52 = vmul.f32 %v47, %v51
    %v53 = vmul.f32 %v43, %v52
    %vm54 = vcmp.eq.f32.partialorder %v43, inf
    %v55 = vsel %vm54, %v43, %v53
    %vm56 = vcmp.eq.f32.partialorder %v43, 0.0
    %v57 = vand.u32 %v43, 2147483648
    %v58 = vsel %vm56, %v57, %v55
    %v59 = vrsqrt.pop %v44
    %v60 = vmul.f32 %v59, %v44
    %v61 = vmul.f32 %v60, %v59
    %v62 = vmul.f32 0.5, %v61
    %v63 = vsub.f32 1.5, %v62
    %v64 = vmul.f32 %v59, %v63
    %v65 = vmul.f32 %v44, %v64
    %vm66 = vcmp.eq.f32.partialorder %v44, inf
    %v67 = vsel %vm66, %v44, %v65
    %vm68 = vcmp.eq.f32.partialorder %v44, 0.0
    %v69 = vand.u32 %v44, 2147483648
    %v70 = vsel %vm68, %v69, %v67
    %v71 = vrsqrt.pop %v45
    %v72 = vmul.f32 %v71, %v45
    %v73 = vmul.f32 %v72, %v71
    %v74 = vmul.f32 0.5, %v73
    %v75 = vsub.f32 1.5, %v74
    %v76 = vmul.f32 %v71, %v75
    %v77 = vmul.f32 %v45, %v76
    %vm78 = vcmp.eq.f32.partialorder %v45, inf
    %v79 = vsel %vm78, %v45, %v77
    %vm80 = vcmp.eq.f32.partialorder %v45, 0.0
    %v81 = vand.u32 %v45, 2147483648
    %v82 = vsel %vm80, %v81, %v79
    %v83 = vrsqrt.pop %v46
    %v84 = vmul.f32 %v83, %v46
    %v85 = vmul.f32 %v84, %v83
    %v86 = vmul.f32 0.5, %v85
    %v87 = vsub.f32 1.5, %v86
    %v88 = vmul.f32 %v83, %v87
    %v89 = vmul.f32 %v46, %v88
    %vm90 = vcmp.eq.f32.partialorder %v46, inf
    %v91 = vsel %vm90, %v46, %v89
    %vm92 = vcmp.eq.f32.partialorder %v46, 0.0
    %v93 = vand.u32 %v46, 2147483648
    %v94 = vsel %vm92, %v93, %v91
    %vm99 = vcmask 1041408
    %v100 = vrot.slane %v58, 6
    %v101 = vrot.slane %v70, 6
    %v102 = vsel %vm99, %v100, %v101
    %v103 = vrot.slane %v82, 6
    %v104 = vrot.slane %v94, 6
    %v105 = vsel %vm99, %v103, %v104
    %v110 = vsel %vm99, 0.0, %v100
    %v111 = vsel %vm99, 0.0, %v103
    %v112 = vld [vmem:[%s2] sm:$0x1]
    %v113 = vperm.slane %v112, 0
    %v114 = vmul.f32 %v110, %v113
    %v115 = vmul.f32 %v102, %v113
    %v116 = vmul.f32 %v111, %v113
    %v117 = vmul.f32 %v105, %v113
    %v118 = vadd.f32 %v114, 0.0
    %v119 = vadd.f32 %v115, 0.0
    %v120 = vadd.f32 %v116, 0.0
    %v121 = vadd.f32 %v117, 0.0
    %vm122 = vcmask 1040384
    %v123 = vrot.slane %v58, 7
    %v124 = vrot.slane %v70, 7
    %v125 = vsel %vm122, %v123, %v124
    %v126 = vrot.slane %v82, 7
    %v127 = vrot.slane %v94, 7
    %v128 = vsel %vm122, %v126, %v127
    %v133 = vsel %vm122, 0.0, %v123
    %v134 = vsel %vm122, 0.0, %v126
    %v135 = vld [vmem:[%s2 + $0x1] sm:$0x1]
    %v136 = vperm.slane %v135, 0
    %v137 = vmul.f32 %v133, %v136
    %v138 = vmul.f32 %v125, %v136
    %v139 = vmul.f32 %v134, %v136
    %v140 = vmul.f32 %v128, %v136
    %v141 = vadd.f32 %v118, %v137
    %v142 = vadd.f32 %v119, %v138
    %v143 = vadd.f32 %v120, %v139
    %v144 = vadd.f32 %v121, %v140
    %v145 = vld [vmem:[%s2 + $0x2] sm:$0x1]
    %v146 = vperm.slane %v145, 0
    %v147 = vmul.f32 %v58, %v146
    %v148 = vmul.f32 %v70, %v146
    %v149 = vmul.f32 %v82, %v146
    %v150 = vmul.f32 %v94, %v146
    %v151 = vadd.f32 %v141, %v147
    %v152 = vadd.f32 %v142, %v148
    %v153 = vadd.f32 %v143, %v149
    %v154 = vadd.f32 %v144, %v150
    %vm155 = vcmask 269312
    %v156 = vsel %vm155, %v151, 0.0
    %v157 = vsel %vm155, %v152, 0.0
    %v158 = vadd.f32 %v156, %v157
    %v159 = vrot.slane %v158, 4
    %v160 = vadd.f32 %v158, %v159
    %v161 = vrot.slane %v160, 2
    %v162 = vadd.f32 %v160, %v161
    %v163 = vrot.slane %v162, 1
    %v164 = vadd.f32 %v162, %v163
    %v165 = vsel %vm155, %v153, 0.0
    %v166 = vsel %vm155, %v154, 0.0
    %v167 = vadd.f32 %v165, %v166
    %v168 = vrot.slane %v167, 4
    %v169 = vadd.f32 %v167, %v168
    %v170 = vrot.slane %v169, 2
    %v171 = vadd.f32 %v169, %v170
    %v172 = vrot.slane %v171, 1
    %v173 = vadd.f32 %v171, %v172
    %v174 = vrcp.pop 16.0
    %v175 = vmul.f32 16.0, %v174
    %v176 = vsub.f32 1.0, %v175
    %v177 = vmul.f32 %v174, %v176
    %v178 = vadd.f32 %v174, %v177
    %vm179 = vweird.f32 %v174
    %v180 = vsel %vm179, %v174, %v178
    %v181 = vmul.f32 %v164, %v180
    %v182 = vmul.f32 %v173, %v180
    %v183 = vsel %vm155, %v181, 0.0
    %v184 = vsel %vm155, %v182, 0.0
    %v185 = vadd.f32 %v183, %v184
    %v186 = vrcp.pop 2.0
    %v187 = vmul.f32 2.0, %v186
    %v188 = vsub.f32 1.0, %v187
    %v189 = vmul.f32 %v186, %v188
    %v190 = vadd.f32 %v186, %v189
    %vm191 = vweird.f32 %v186
    %v192 = vsel %vm191, %v186, %v190
    %v193 = vmul.f32 %v185, %v192
    %v194 = vsub.f32 %v151, %v193
    %v195 = vsub.f32 %v152, %v193
    %v196 = vsub.f32 %v153, %v193
    %v197 = vsub.f32 %v154, %v193
    %v198 = vmul.f32 %v194, %v194
    %v199 = vmul.f32 %v195, %v195
    %v200 = vmul.f32 %v196, %v196
    %v201 = vmul.f32 %v197, %v197
    %v202 = vsel %vm155, %v198, 0.0
    %v203 = vsel %vm155, %v199, 0.0
    %v204 = vadd.f32 %v202, %v203
    %v205 = vrot.slane %v204, 4
    %v206 = vadd.f32 %v204, %v205
    %v207 = vrot.slane %v206, 2
    %v208 = vadd.f32 %v206, %v207
    %v209 = vrot.slane %v208, 1
    %v210 = vadd.f32 %v208, %v209
    %v211 = vsel %vm155, %v200, 0.0
    %v212 = vsel %vm155, %v201, 0.0
    %v213 = vadd.f32 %v211, %v212
    %v214 = vrot.slane %v213, 4
    %v215 = vadd.f32 %v213, %v214
    %v216 = vrot.slane %v215, 2
    %v217 = vadd.f32 %v215, %v216
    %v218 = vrot.slane %v217, 1
    %v219 = vadd.f32 %v217, %v218
    %v220 = vmul.f32 %v210, %v180
    %v221 = vmul.f32 %v219, %v180
    %v222 = vsel %vm155, %v220, 0.0
    %v223 = vsel %vm155, %v221, 0.0
    %v224 = vadd.f32 %v222, %v223
    %v225 = vmul.f32 %v224, %v192
    %v226 = vadd.f32 %v225, 1e-05
    %v227 = vrsqrt.pop %v226
    %v228 = vmul.f32 %v227, %v226
    %v229 = vmul.f32 %v228, %v227
    %v230 = vmul.f32 0.5, %v229
    %v231 = vsub.f32 1.5, %v230
    %v232 = vmul.f32 %v227, %v231
    %vm233 = vweird.f32 %v226
    %vm234 = vweird.f32 %v227
    %vm235 = vmor %vm233, %vm234
    %v236 = vsel %vm235, %v227, %v232
    %v237 = vmul.f32 %v194, %v236
    %v238 = vmul.f32 %v195, %v236
    %v239 = vmul.f32 %v196, %v236
    %v240 = vmul.f32 %v197, %v236
    %v241 = vld [vmem:[%s3] sm:$0x1]
    %v243 = vperm.slane %v241, 0
    %v245 = vmul.f32 %v237, %v243
    %v246 = vmul.f32 %v238, %v243
    %v247 = vmul.f32 %v239, %v243
    %v248 = vmul.f32 %v240, %v243
    %v249 = vld [vmem:[%s4] sm:$0x1]
    %v251 = vperm.slane %v249, 0
    %v253 = vadd.f32 %v245, %v251
    %v254 = vadd.f32 %v246, %v251
    %v255 = vadd.f32 %v247, %v251
    %v256 = vadd.f32 %v248, %v251
    %v257 = vld [vmem:[%s5] sm:$0xff]
    %v258 = vld [vmem:[%s5 + $0x8] sm:$0xff]
    %v259 = vld [vmem:[%s5 + $0x10] sm:$0xff]
    %v260 = vld [vmem:[%s5 + $0x18] sm:$0xff]
    %v261 = vld [vmem:[%s5 + $0x20] sm:$0x1]
    %v262 = vld [vmem:[%s6] sm:$0x1]
    %v264 = vperm.slane %v262, 0
    %v267 = vsel %vm155, %v253, 0
    %v270 = vsel %vm155, %v254, 0
    %v273 = vsel %vm122, %v261, 0
    %275 = vmatpush.msra.mxu0 0.0
    %276 = vmatpush.msra.mxu0 0.0
    %277 = vmatpush.msra.mxu0 0.0
    %278 = vmatpush.msra.mxu0 0.0
    %279 = vmatpush.msra.mxu0 0.0
    %280 = vmatpush.msra.mxu0 0.0
    %281 = vmatpush.msra.mxu0 0.0
    %282 = vmatpush.msra.mxu0 0.0
    %283 = vmatpush.msra.mxu0 0.0
    %284 = vmatpush.msra.mxu0 0.0
    %285 = vmatpush.msra.mxu0 0.0
    %286 = vmatpush.msra.mxu0 %v273
    %287 = vmatpush.msra.mxu0 %v260
    %288 = vmatpush.msra.mxu0 %v259
    %289 = vmatpush.msra.mxu0 %v258
    %290 = vmatpush.msra.mxu0 %v257
    %291 = vmatmul.f32.gmra.mxu0 %v267
    %v292 = vpop.f32.mrf.mxu0
    %v293 = vadd.f32 %v264, %v292
    %294 = vmatmul.f32.gmra.mxu0 %v270
    %v295 = vpop.f32.mrf.mxu0
    %v296 = vadd.f32 %v264, %v295
    %297 = vdwg.mxu0
    %vm298 = vcmask 261120
    %299 = vst.msk [vmem:[#allocation2] sm:$0xff] %vm298, %v293
    %300 = vst.msk [vmem:[#allocation2 + $0x8] sm:$0xff] %vm298, %v296
    %v301 = vld [vmem:[%s5] sm:$0xff]
    %v302 = vld [vmem:[%s5 + $0x8] sm:$0xff]
    %v303 = vld [vmem:[%s5 + $0x10] sm:$0xff]
    %v304 = vld [vmem:[%s5 + $0x18] sm:$0xff]
    %v305 = vld [vmem:[%s5 + $0x20] sm:$0x1]
    %v306 = vld [vmem:[%s6] sm:$0x1]
    %v308 = vperm.slane %v306, 0
    %v311 = vsel %vm155, %v255, 0
    %v314 = vsel %vm155, %v256, 0
    %v317 = vsel %vm122, %v305, 0
    %319 = vmatpush.msra.mxu0 0.0
    %320 = vmatpush.msra.mxu0 0.0
    %321 = vmatpush.msra.mxu0 0.0
    %322 = vmatpush.msra.mxu0 0.0
    %323 = vmatpush.msra.mxu0 0.0
    %324 = vmatpush.msra.mxu0 0.0
    %325 = vmatpush.msra.mxu0 0.0
    %326 = vmatpush.msra.mxu0 0.0
    %327 = vmatpush.msra.mxu0 0.0
    %328 = vmatpush.msra.mxu0 0.0
    %329 = vmatpush.msra.mxu0 0.0
    %330 = vmatpush.msra.mxu0 %v317
    %331 = vmatpush.msra.mxu0 %v304
    %332 = vmatpush.msra.mxu0 %v303
    %333 = vmatpush.msra.mxu0 %v302
    %334 = vmatpush.msra.mxu0 %v301
    %335 = vmatmul.f32.gmra.mxu0 %v311
    %v336 = vpop.f32.mrf.mxu0
    %v337 = vadd.f32 %v308, %v336
    %338 = vmatmul.f32.gmra.mxu0 %v314
    %v339 = vpop.f32.mrf.mxu0
    %v340 = vadd.f32 %v308, %v339
    %341 = vdwg.mxu0
    %s342 = scalar_lea.vmem [#allocation2], 16
    %343 = vst.msk [vmem:[%s342] sm:$0xff] %vm298, %v337
    %344 = vst.msk [vmem:[%s342 + $0x8] sm:$0xff] %vm298, %v340
    // Predicated region
    $region30: #{tpu_custom_call.1} parent=1 // pred_check
      _
    $region31: #{tpu_custom_call.1} parent=1 // pred_check_branch
      %346 = sbr.rel (0) target = $region33
    $region32: #{tpu_custom_call.1} parent=1 // pred_region
      %348 = vsyncadd [#allocation3], 0
      %s349 = sshll.u32 [#allocation2], 4
      %s350 = int_to_ptr.vmem [resolvable:$true] %s349
      %s351 = sshll.u32 %s7, 4
      %s352 = int_to_ptr.hbm [resolvable:$true] %s351
      %357 = dma.vmem_to_hbm [thread:$0]  %s350, 512, %s352, [#allocation3], 128, 128, 8
    $region33: #{tpu_custom_call.1} parent=1 // pred_fallthru
      _
    // Predicated region
    $region34: #{tpu_custom_call.1} parent=1 // pred_check
      _
    $region35: #{tpu_custom_call.1} parent=1 // pred_check_branch
      %359 = sbr.rel (0) target = $region37
    $region36: #{tpu_custom_call.1} parent=1 // pred_region
      %361 = dma.done [#allocation3], 512
    $region37: #{tpu_custom_call.1} parent=1 // pred_fallthru
      _
    %362 = vsyncpa [#allocation3], 1

</llo_original>
